<compile_context>
chip_gen: v6e
topology: v6e:2x2x1
jax: 0.10.0
libtpu: 0.0.40
codegen_flags: <defaults>
</compile_context>

<pallas_src>
import functools

import jax
import jax.numpy as jnp
from jax.experimental import pallas as pl
from jax.experimental.pallas import tpu as pltpu


# --------------------------------------------------------------------------- #
# Kernel body
# --------------------------------------------------------------------------- #
def _rmsnorm_kernel(x_ref, w_ref, o_ref, *, eps):
    # x_ref: (tile_rows, hidden), w_ref: (1, hidden), o_ref: (tile_rows, hidden)
    x_f32 = x_ref[...].astype(jnp.float32)                  # single cast, reused
    variance = jnp.mean(x_f32 * x_f32, axis=-1, keepdims=True)
    inv = jax.lax.rsqrt(variance + eps)                     # EUP op (free slot)
    h = x_f32 * inv                                         # reuse x_f32 (no 2nd cast)
    w = w_ref[...]
    # torch ref: cast back to half precision only if weight is fp16/bf16
    if w.dtype in (jnp.float16, jnp.bfloat16):
        h = h.astype(w.dtype)
    o_ref[...] = (w * h).astype(o_ref.dtype)


# --------------------------------------------------------------------------- #
# Tiling helpers
# --------------------------------------------------------------------------- #
def _round_up(x, m):
    return ((x + m - 1) // m) * m


def _round_down(x, m):
    return (x // m) * m


def _physical_vmem_bytes():
    """Per-chip VMEM capacity (128 MiB v5e/v6e, 64 MiB v7x); conservative fallback."""
    try:
        return int(pltpu.get_tpu_info().vmem_capacity_bytes)
    except Exception:
        return 64 * 1024 * 1024  # v7x per-TC value — safe everywhere


def _pick_tile_rows(rows, hidden, x_dtype, out_dtype, phys_vmem):
    x_b = jnp.dtype(x_dtype).itemsize
    o_b = jnp.dtype(out_dtype).itemsize
    # Sublane packing: 8 for f32, 16 for bf16/f16, 32 for int8/fp8.
    sublane = max(32 // min(x_b, o_b), 8)

    # ~55% of physical VMEM for the double-buffered in+out blocks; the rest is
    # headroom for the weight block, semaphores and compiler scratch.
    budget = int(phys_vmem * 0.55)
    per_row_bytes = hidden * (x_b + o_b) * 2                # x2 for double buffering
    cap = max(budget // max(per_row_bytes, 1), sublane)
    cap = min(cap, 2048)                                    # overhead already amortized
    cap = min(cap, _round_up(rows, sublane))                # no bigger than the data
    # Keep at least ~4 grid steps when rows permit (v7x has 2 TensorCores).
    if rows > 4 * sublane:
        cap = min(cap, _round_up(-(-rows // 4), sublane))
    tile_rows = max(_round_down(cap, sublane), sublane)
    return tile_rows, sublane


# --------------------------------------------------------------------------- #
# Wrapper
# --------------------------------------------------------------------------- #
def t5_layernorm(x, weight, eps=1e-6, tile_rows=None):
    """x: (..., hidden); weight: (hidden,). Returns weight * x * rsqrt(mean(x^2)+eps)."""
    orig_shape = x.shape
    hidden = orig_shape[-1]
    rows = 1
    for d in orig_shape[:-1]:
        rows *= d

    x2d = x.reshape(rows, hidden)
    w2d = weight.reshape(1, hidden)

    # Output dtype follows torch semantics of `weight * hidden_states`.
    if weight.dtype in (jnp.float16, jnp.bfloat16):
        out_dtype = weight.dtype
    else:
        out_dtype = jnp.promote_types(weight.dtype, jnp.float32)

    phys_vmem = _physical_vmem_bytes()
    if tile_rows is None:
        tile_rows, _ = _pick_tile_rows(rows, hidden, x.dtype, out_dtype, phys_vmem)

    grid = (pl.cdiv(rows, tile_rows),)  # ragged last block: masked writes, row-local math

    # VMEM budget: double-buffered in+out blocks + weight + slack, never above HW.
    block_bytes = tile_rows * hidden * (
        jnp.dtype(x.dtype).itemsize + jnp.dtype(out_dtype).itemsize
    )
    weight_bytes = hidden * jnp.dtype(weight.dtype).itemsize
    vmem_limit = int(
        min(int(phys_vmem * 0.9),
            max(2 * block_bytes + 2 * weight_bytes + (2 << 20), 32 << 20))
    )

    # TODO(synk): for hidden < 128, fold rows into the lane axis (lane-dense blocks)
    #             instead of issuing sub-128-lane masked stores (test-only shapes).
    # TODO(synk): for very wide hidden (>=32K f32) add a second "arbitrary" grid axis
    #             with a two-pass sum(x^2) accumulation instead of shrinking tile_rows.

    out = pl.pallas_call(
        functools.partial(_rmsnorm_kernel, eps=eps),
        out_shape=jax.ShapeDtypeStruct((rows, hidden), out_dtype),
        grid_spec=pltpu.PrefetchScalarGridSpec(
            num_scalar_prefetch=0,
            grid=grid,
            in_specs=[
                pl.BlockSpec((tile_rows, hidden), lambda i: (i, 0)),
                pl.BlockSpec((1, hidden), lambda i: (0, 0)),
            ],
            out_specs=pl.BlockSpec((tile_rows, hidden), lambda i: (i, 0)),
        ),
        compiler_params=pltpu.CompilerParams(
            dimension_semantics=("parallel",),
            vmem_limit_bytes=vmem_limit,
        ),
    )(x2d, w2d)
    return out.reshape(orig_shape)


# --------------------------------------------------------------------------- #
# Reference (mirrors the torch forward exactly)
# --------------------------------------------------------------------------- #
def _reference(x, weight, eps):
    xf = x.astype(jnp.float32)
    var = jnp.mean(xf * xf, axis=-1, keepdims=True)
    h = xf * jax.lax.rsqrt(var + eps)
    if weight.dtype in (jnp.float16, jnp.bfloat16):
        h = h.astype(weight.dtype)
    return weight * h


if __name__ == "__main__":
    # Test 1: shapes implied by the module (small), f32 weight (ones) + f32 input.
    key = jax.random.PRNGKey(0)
    batch, seq, hidden = 2, 8, 32
    x = jax.random.normal(key, (batch, seq, hidden), dtype=jnp.float32)
    weight = jnp.ones((hidden,), dtype=jnp.float32)  # nn.Parameter(torch.ones(ndim))

    y = t5_layernorm(x, weight, eps=1e-6)
    jax.block_until_ready(y)
    ref = _reference(x, weight, 1e-6)
    assert y.shape == x.shape
    assert y.dtype == ref.dtype
    assert jnp.allclose(y, ref, atol=1e-5, rtol=1e-5)

    # Test 2: bf16 input + bf16 weight, ragged row count, lane-dense hidden (256).
    x2 = jax.random.normal(jax.random.PRNGKey(0), (3, 24, 256),
                           dtype=jnp.float32).astype(jnp.bfloat16)
    w2 = (1.0 + 0.1 * jax.random.normal(jax.random.PRNGKey(1), (256,),
                                        dtype=jnp.float32)).astype(jnp.bfloat16)
    y2 = t5_layernorm(x2, w2, eps=1e-6)
    jax.block_until_ready(y2)
    ref2 = _reference(x2, w2, 1e-6)
    assert y2.shape == x2.shape
    assert y2.dtype == jnp.bfloat16
    assert jnp.allclose(y2.astype(jnp.float32), ref2.astype(jnp.float32),
                        atol=3e-2, rtol=3e-2)

    print("KERNEL_OK")
</pallas_src>

<mosaic_0001>
module attributes {stable_mosaic.version = 11 : i64} {
  func.func @_rmsnorm_kernel(%arg0: i32, %arg1: memref<16x32xf32, #tpu.memory_space<vmem>>, %arg2: memref<1x32xf32, #tpu.memory_space<vmem>>, %arg3: memref<16x32xf32, #tpu.memory_space<vmem>>) attributes {dimension_semantics = [#tpu.dimension_semantics<parallel>], iteration_bounds = array<i64: 1>, scalar_prefetch = 0 : i64, scratch_operands = 0 : i64, tpu.core_type = #tpu.core_type<tc>, window_params = [{transform_indices = @transform_0, window_bounds = array<i64: 16, 32>}, {pipeline_mode = #tpu.pipeline_mode<synchronous>, transform_indices = @transform_1, window_bounds = array<i64: 1, 32>}, {transform_indices = @transform_2, window_bounds = array<i64: 16, 32>}]} {
    %c0 = arith.constant 0 : index
    %c0_0 = arith.constant 0 : index
    %0 = vector.load %arg1[%c0, %c0_0] : memref<16x32xf32, #tpu.memory_space<vmem>>, vector<16x32xf32>
    %1 = arith.mulf %0, %0 : vector<16x32xf32>
    %cst = arith.constant dense<0.000000e+00> : vector<16xf32>
    %2 = vector.multi_reduction <add>, %1, %cst [1] : vector<16x32xf32> to vector<16xf32>
    %3 = vector.shape_cast %2 : vector<16xf32> to vector<16x1xf32>
    %cst_1 = arith.constant 3.200000e+01 : f32
    %4 = vector.broadcast %cst_1 : f32 to vector<16x1xf32>
    %5 = arith.divf %3, %4 : vector<16x1xf32>
    %cst_2 = arith.constant 9.99999997E-7 : f32
    %6 = vector.broadcast %cst_2 : f32 to vector<16x1xf32>
    %7 = arith.addf %5, %6 : vector<16x1xf32>
    %8 = math.rsqrt %7 : vector<16x1xf32>
    %9 = vector.broadcast %8 : vector<16x1xf32> to vector<16x32xf32>
    %10 = arith.mulf %0, %9 : vector<16x32xf32>
    %c0_3 = arith.constant 0 : index
    %c0_4 = arith.constant 0 : index
    %11 = vector.load %arg2[%c0_3, %c0_4] : memref<1x32xf32, #tpu.memory_space<vmem>>, vector<1x32xf32>
    %12 = vector.broadcast %11 : vector<1x32xf32> to vector<16x32xf32>
    %13 = arith.mulf %12, %10 : vector<16x32xf32>
    %c0_5 = arith.constant 0 : index
    %c0_6 = arith.constant 0 : index
    %14 = vector.load %arg3[%c0_5, %c0_6] : memref<16x32xf32, #tpu.memory_space<vmem>>, vector<16x32xf32>
    tpu.vector_store %arg3[%c0_5, %c0_6], %13 {strides = array<i32>} : memref<16x32xf32, #tpu.memory_space<vmem>>, vector<16x32xf32>,
    return
  }
  func.func @transform_0(%arg0: i32) -> (i32, i32) {
    %c0_i32 = arith.constant 0 : i32
    %c0_i32_0 = arith.constant 0 : i32
    return %arg0, %c0_i32 : i32, i32
  }
  func.func @transform_1(%arg0: i32) -> (i32, i32) {
    %c0_i32 = arith.constant 0 : i32
    %c0_i32_0 = arith.constant 0 : i32
    %c0_i32_1 = arith.constant 0 : i32
    return %c0_i32, %c0_i32_0 : i32, i32
  }
  func.func @transform_2(%arg0: i32) -> (i32, i32) {
    %c0_i32 = arith.constant 0 : i32
    %c0_i32_0 = arith.constant 0 : i32
    return %arg0, %c0_i32 : i32, i32
  }
}

</mosaic_0001>

<llo_original>
// kernel: tpu_custom_call.1
$region0: #{tpu_custom_call.1}
  #allocation0 [shape = 'u32[]', space=smem, size = 0x4, offset = 0x4, fixed_abs, tag = 'smem constant byte address 0x4 - core index']
  #allocation1 [shape = 'u32[144,128]{1,0:T(1,128)}', space=vmem, size = 0x12000, scoped, tag = 'internal scratch']
  %s0 = inlined_call_operand.hbm [shape: f32[16,32], index: 0, kind: input, shape index: {}]
  %s1 = inlined_call_operand.vmem [shape: f32[1,32], index: 1, kind: input, shape index: {}]
  %s2 = inlined_call_operand.hbm [shape: f32[16,32], index: 2, kind: output, shape index: {}]
  %s3 = sld [smem:[#allocation0]]
  $region22: #{tpu_custom_call.1} parent=0
    _
  %s5 = ssub.s32 1, %s3
  %s6 = scalar_select 0, %s5, %s3
  $region1: #{tpu_custom_call.1} parent=0
    #allocation2 [shape = 'u8[8192]{0}', space=vmem, size = 0x2000, scoped, tag = 'input window, operand 0, single buffered']
    #allocation3 [shape = 's32[1]{0}', space=sflag, size = 0x4, scoped, tag = 'scoped memory for tpu_custom_call.1']
    #allocation4 [shape = 's32[1]{0}', space=sflag, size = 0x4, scoped, tag = 'scoped memory for tpu_custom_call.1']
    #allocation5 [shape = 'u8[8192]{0}', space=vmem, size = 0x2000, scoped, tag = 'output window, operand 0, single buffered']
    %7 = vsyncpa [#allocation3], 0
    %8 = vsyncpa [#allocation4], 0
    // Predicated region
    $region2: #{tpu_custom_call.1} parent=1 // pred_check
      _
    $region3: #{tpu_custom_call.1} parent=1 // pred_check_branch
      %10 = sbr.rel (0) target = $region5
    $region4: #{tpu_custom_call.1} parent=1 // pred_region
      %s12 = ssub.s32 256, 256
      %13 = vsyncadd [#allocation3], %s12
      %s14 = sshll.u32 [#allocation2], 4
      %s15 = int_to_ptr.vmem [resolvable:$true] %s14
      %20 = dma.hbm_to_vmem [thread:$0]  %s0, 256, %s15, [#allocation3], 128, 128, 8
    $region5: #{tpu_custom_call.1} parent=1 // pred_fallthru
      _
    // Predicated region
    $region6: #{tpu_custom_call.1} parent=1 // pred_check
      _
    $region7: #{tpu_custom_call.1} parent=1 // pred_check_branch
      %22 = sbr.rel (0) target = $region9
    $region8: #{tpu_custom_call.1} parent=1 // pred_region
      _
    $region9: #{tpu_custom_call.1} parent=1 // pred_fallthru
      _
    // Predicated region
    $region10: #{tpu_custom_call.1} parent=1 // pred_check
      _
    $region11: #{tpu_custom_call.1} parent=1 // pred_check_branch
      %24 = sbr.rel (0) target = $region13
    $region12: #{tpu_custom_call.1} parent=1 // pred_region
      %25 = dma.done [#allocation3], 256
    $region13: #{tpu_custom_call.1} parent=1 // pred_fallthru
      _
    %v26 = vld [vmem:[#allocation2] sm:$0xff]
    %v27 = vld [vmem:[#allocation2 + $0x8] sm:$0xff]
    %v28 = vmul.f32 %v26, %v26
    %v29 = vmul.f32 %v27, %v27
    %vm30 = vcmask 261120
    %v31 = vsel %vm30, %v28, 0.0
    %32 = vadd.xlane.f32.xlu0 %v31
    %v33 = vpop.xlane.xlu0 %32
    %v34 = vsel %vm30, %v29, 0.0
    %35 = vadd.xlane.f32.xlu0 %v34
    %v36 = vpop.xlane.xlu0 %35
    %v37 = vrcp.pop 32.0
    %v38 = vmul.f32 %v33, %v37
    %v39 = vmul.f32 %v36, %v37
    %v40 = vadd.f32 %v38, 1e-06
    %v41 = vadd.f32 %v39, 1e-06
    %v42 = vrsqrt.pop %v40
    %v43 = vrsqrt.pop %v41
    %v44 = vmul.f32 %v26, %v42
    %v45 = vmul.f32 %v27, %v43
    %v46 = vld [vmem:[%s1] sm:$0x1]
    %v48 = vlaneseq
    %v49 = vshrl.u32 %v48, 7
    %v50 = vsub.s32 0, %v49
    %v51 = vrot.slane %v46, %v50
    %v53 = vmul.f32 %v51, %v44
    %v54 = vmul.f32 %v51, %v45
    %55 = vst.msk [vmem:[#allocation5] sm:$0xff] %vm30, %v53
    %56 = vst.msk [vmem:[#allocation5 + $0x8] sm:$0xff] %vm30, %v54
    // Predicated region
    $region14: #{tpu_custom_call.1} parent=1 // pred_check
      _
    $region15: #{tpu_custom_call.1} parent=1 // pred_check_branch
      %58 = sbr.rel (0) target = $region17
    $region16: #{tpu_custom_call.1} parent=1 // pred_region
      %s60 = ssub.s32 256, 256
      %61 = vsyncadd [#allocation4], %s60
      %s62 = sshll.u32 [#allocation5], 4
      %s63 = int_to_ptr.vmem [resolvable:$true] %s62
      %68 = dma.vmem_to_hbm [thread:$0]  %s63, 256, %s2, [#allocation4], 128, 128, 8
    $region17: #{tpu_custom_call.1} parent=1 // pred_fallthru
      _
    // Predicated region
    $region18: #{tpu_custom_call.1} parent=1 // pred_check
      _
    $region19: #{tpu_custom_call.1} parent=1 // pred_check_branch
      %70 = sbr.rel (0) target = $region21
    $region20: #{tpu_custom_call.1} parent=1 // pred_region
      %71 = dma.done [#allocation4], 256
    $region21: #{tpu_custom_call.1} parent=1 // pred_fallthru
      _
    %72 = vsyncpa [#allocation3], 1
    %73 = vsyncpa [#allocation4], 1

</llo_original>
